<compile_context>
chip_gen: v7x
topology: tpu7x:2x2x1
jax: 0.10.0
libtpu: 0.0.40
codegen_flags: <defaults>
</compile_context>

<pallas_src>
import jax
import jax.numpy as jnp
from jax.experimental import pallas as pl
from jax.experimental.pallas import tpu as pltpu


def _round_up(x, m):
    return ((x + m - 1) // m) * m


def _fc_kernel(feats_ref, w1_ref, b1_ref, w2_ref, b2_ref, out_ref):
    # Linear(in,128) -> ReLU -> Linear(128,out), fused; h never touches HBM.
    h = jnp.dot(feats_ref[...], w1_ref[...], preferred_element_type=jnp.float32)
    h = jnp.maximum(h + b1_ref[...].astype(jnp.float32), 0.0)
    # Cast h to the operand dtype so the second dot is a uniform-precision MXU pass
    # (no-op for f32 operands; bf16 x bf16 with f32 accumulation for bf16 operands).
    x = jnp.dot(h.astype(w2_ref.dtype), w2_ref[...],
                preferred_element_type=jnp.float32)
    out_ref[...] = (x + b2_ref[...].astype(jnp.float32)).astype(out_ref.dtype)


def _vmem_budget():
    """Generation-aware (budget_for_pipeline_buffers, vmem_limit_bytes)."""
    try:
        physical = int(pltpu.get_tpu_info().vmem_capacity_bytes)
    except Exception:
        physical = 64 * 1024 * 1024  # conservative: v7x per-TensorCore VMEM
    budget = (physical * 3) // 4          # v5e/v6e ~96 MiB, v7x ~48 MiB
    limit = min(physical, budget + (8 << 20))
    return budget, limit


def _pick_tile_rows(n, in_size, out_size, comp_item, out_item, budget):
    """Row tile sized against an honest VMEM accounting of the pipeline buffers."""
    hidden = 128
    # Sublane alignment for the packed operand dtype (f32: 8, bf16: 16, int8: 32).
    row_align = max(8, 32 // comp_item)
    in_lanes = _round_up(in_size, 128)    # VMEM blocks are lane-padded to 128
    out_lanes = _round_up(out_size, 128)

    # Grid-invariant operands; the default pipeline double-buffers them too.
    # (Single-buffering via pipeline_mode=pl.Buffered(1) would reclaim half of
    #  this; we keep the default for compatibility and just budget for it.)
    fixed = (2 * (_round_up(in_size, row_align) * hidden
                  + hidden * out_lanes) * comp_item
             + 2 * (8 * hidden + 8 * out_lanes) * 4)          # f32 biases

    # Per-row bytes: double-buffered feats + out tiles (lane padded), the f32 `h`
    # intermediate, and its cast copy feeding the second dot.
    per_row = (2 * in_lanes * comp_item
               + 2 * out_lanes * out_item
               + hidden * 4
               + hidden * comp_item)

    avail = max(budget - fixed, row_align * per_row)
    tile = (avail // per_row) // row_align * row_align
    tile = max(row_align, min(tile, 8192, _round_up(n, row_align)))

    # v7x has 2 TensorCores; the "parallel" grid axis is the only thing sharding
    # tiles across them, so avoid a 1-step grid when there is enough work.
    if n > row_align and pl.cdiv(n, tile) < 2:
        tile = max(row_align, _round_up(pl.cdiv(n, 2), row_align))
    return tile


def fc_layer_forward(feats, w1, b1, w2, b2, *, tile_rows=None, compute_dtype=None):
    """Pallas implementation of FCLayer.forward. Returns (feats, x).

    compute_dtype: optional dtype (e.g. jnp.bfloat16) in which feats/w1/w2 are
    streamed to the MXU (f32 accumulation).  None keeps the caller's dtype.
    """
    n, in_size = feats.shape
    hidden = w1.shape[1]
    out_size = w2.shape[1]
    out_dtype = feats.dtype

    if compute_dtype is not None:
        comp_dt = jnp.dtype(compute_dtype)
        feats_c = feats.astype(comp_dt)
        w1_c = w1.astype(comp_dt)
        w2_c = w2.astype(comp_dt)
    else:
        comp_dt = jnp.dtype(feats.dtype)
        feats_c, w1_c, w2_c = feats, w1, w2

    # Biases stay f32 (tiny; bias add + ReLU run in f32 inside the kernel).
    b1_c = b1.reshape(1, hidden).astype(jnp.float32)
    b2_c = b2.reshape(1, out_size).astype(jnp.float32)

    comp_item = comp_dt.itemsize
    out_item = jnp.dtype(out_dtype).itemsize

    vmem_budget, vmem_limit = _vmem_budget()
    if tile_rows is None:
        tile_rows = _pick_tile_rows(n, in_size, out_size, comp_item, out_item,
                                    vmem_budget)
    row_align = max(8, 32 // comp_item)
    tile_rows = max(row_align, (int(tile_rows) // row_align) * row_align)

    # Ragged last block handled by Pallas; no wrapper-side padding of feats.
    grid = (pl.cdiv(n, tile_rows),)

    cost = pl.CostEstimate(
        flops=2 * n * hidden * (in_size + out_size),
        transcendentals=0,
        bytes_accessed=(n * in_size * comp_item
                        + n * out_size * out_item
                        + (in_size * hidden + hidden * out_size) * comp_item
                        + (hidden + out_size) * 4),
    )

    x = pl.pallas_call(
        _fc_kernel,
        out_shape=jax.ShapeDtypeStruct((n, out_size), out_dtype),
        grid=grid,
        in_specs=[
            pl.BlockSpec((tile_rows, in_size), lambda i: (i, 0)),   # streamed
            pl.BlockSpec((in_size, hidden), lambda i: (0, 0)),      # resident w1
            pl.BlockSpec((1, hidden), lambda i: (0, 0)),            # resident b1
            pl.BlockSpec((hidden, out_size), lambda i: (0, 0)),     # resident w2
            pl.BlockSpec((1, out_size), lambda i: (0, 0)),          # resident b2
        ],
        out_specs=pl.BlockSpec((tile_rows, out_size), lambda i: (i, 0)),
        compiler_params=pltpu.CompilerParams(
            dimension_semantics=("parallel",),
            vmem_limit_bytes=int(vmem_limit),
        ),
        cost_estimate=cost,
    )(feats_c, w1_c, b1_c, w2_c, b2_c)

    return feats, x


def init_fc_layer_params(key, in_size, out_size=1, hidden=128, dtype=jnp.float32):
    """Deterministic synthetic init matching nn.Linear shapes (W stored as (in, out))."""
    k1, k2, k3, k4 = jax.random.split(key, 4)
    lim1 = 1.0 / (in_size ** 0.5)
    lim2 = 1.0 / (hidden ** 0.5)
    w1 = jax.random.uniform(k1, (in_size, hidden), dtype, -lim1, lim1)
    b1 = jax.random.uniform(k2, (1, hidden), dtype, -lim1, lim1)
    w2 = jax.random.uniform(k3, (hidden, out_size), dtype, -lim2, lim2)
    b2 = jax.random.uniform(k4, (1, out_size), dtype, -lim2, lim2)
    return w1, b1, w2, b2


if __name__ == "__main__":
    key = jax.random.PRNGKey(0)
    k1, k2, k3, k4, k5, k6 = jax.random.split(key, 6)

    # Case 1: module defaults (out_size=1), tiny MIL bag, exact f32 path.
    N, IN, OUT = 8, 32, 1
    feats = jax.random.normal(k1, (N, IN), jnp.float32)
    w1, b1, w2, b2 = init_fc_layer_params(k2, IN, OUT)
    feats_out, x = fc_layer_forward(feats, w1, b1, w2, b2)
    jax.block_until_ready((feats_out, x))
    x_ref = jnp.maximum(feats @ w1 + b1, 0.0) @ w2 + b2
    assert x.shape == (N, OUT)
    assert jnp.allclose(feats_out, feats)
    assert jnp.allclose(x, x_ref, atol=1e-5, rtol=1e-5)

    # Case 2: out_size > 1, ragged N=13 -> 2 grid steps with a partial last block
    # (exercises the no-pad boundary handling and the >=2-step rule).
    N2, IN2, OUT2 = 13, 32, 8
    feats2 = jax.random.normal(k3, (N2, IN2), jnp.float32)
    w1b, b1b, w2b, b2b = init_fc_layer_params(k4, IN2, OUT2)
    _, x2 = fc_layer_forward(feats2, w1b, b1b, w2b, b2b)
    jax.block_until_ready(x2)
    x2_ref = jnp.maximum(feats2 @ w1b + b1b, 0.0) @ w2b + b2b
    assert x2.shape == (N2, OUT2)
    assert jnp.allclose(x2, x2_ref, atol=1e-5, rtol=1e-5)

    # Case 3: bf16 operand streaming (halves the feats HBM stream), f32 accumulate,
    # f32 output dtype preserved.  Relaxed tolerance for bf16 operand rounding.
    N3, IN3, OUT3 = 300, 64, 1
    feats3 = jax.random.normal(k5, (N3, IN3), jnp.float32)
    w1c, b1c, w2c, b2c = init_fc_layer_params(k6, IN3, OUT3)
    _, x3 = fc_layer_forward(feats3, w1c, b1c, w2c, b2c, compute_dtype=jnp.bfloat16)
    jax.block_until_ready(x3)
    x3_ref = jnp.maximum(feats3 @ w1c + b1c, 0.0) @ w2c + b2c
    assert x3.shape == (N3, OUT3)
    assert x3.dtype == feats3.dtype
    assert jnp.allclose(x3, x3_ref, atol=5e-2, rtol=5e-2)

    print("KERNEL_OK")
</pallas_src>

<mosaic_0001>
module attributes {stable_mosaic.version = 11 : i64} {
  func.func @_fc_kernel(%arg0: i32, %arg1: memref<8x32xf32, #tpu.memory_space<vmem>>, %arg2: memref<32x128xf32, #tpu.memory_space<vmem>>, %arg3: memref<1x128xf32, #tpu.memory_space<vmem>>, %arg4: memref<128x1xf32, #tpu.memory_space<vmem>>, %arg5: memref<1x1xf32, #tpu.memory_space<vmem>>, %arg6: memref<8x1xf32, #tpu.memory_space<vmem>>) attributes {dimension_semantics = [#tpu.dimension_semantics<parallel>], iteration_bounds = array<i64: 1>, scalar_prefetch = 0 : i64, scratch_operands = 0 : i64, tpu.core_type = #tpu.core_type<tc>, window_params = [{transform_indices = @transform_0, window_bounds = array<i64: 8, 32>}, {pipeline_mode = #tpu.pipeline_mode<synchronous>, transform_indices = @transform_1, window_bounds = array<i64: 32, 128>}, {pipeline_mode = #tpu.pipeline_mode<synchronous>, transform_indices = @transform_2, window_bounds = array<i64: 1, 128>}, {pipeline_mode = #tpu.pipeline_mode<synchronous>, transform_indices = @transform_3, window_bounds = array<i64: 128, 1>}, {pipeline_mode = #tpu.pipeline_mode<synchronous>, transform_indices = @transform_4, window_bounds = array<i64: 1, 1>}, {transform_indices = @transform_5, window_bounds = array<i64: 8, 1>}]} {
    %c0 = arith.constant 0 : index
    %c0_0 = arith.constant 0 : index
    %0 = vector.load %arg1[%c0, %c0_0] : memref<8x32xf32, #tpu.memory_space<vmem>>, vector<8x32xf32>
    %c0_1 = arith.constant 0 : index
    %c0_2 = arith.constant 0 : index
    %1 = vector.load %arg2[%c0_1, %c0_2] : memref<32x128xf32, #tpu.memory_space<vmem>>, vector<32x128xf32>
    %cst = arith.constant dense<0.000000e+00> : vector<8x128xf32>
    %2 = tpu.matmul %0, %1, %cst {dimension_numbers = #tpu.dot_dimension_numbers<[1], [0], [0], [1], [0, 0, 1, 1], [], []>} : vector<8x32xf32>, vector<32x128xf32>, vector<8x128xf32> -> vector<8x128xf32>
    %c0_3 = arith.constant 0 : index
    %c0_4 = arith.constant 0 : index
    %3 = vector.load %arg3[%c0_3, %c0_4] : memref<1x128xf32, #tpu.memory_space<vmem>>, vector<1x128xf32>
    %4 = vector.broadcast %3 : vector<1x128xf32> to vector<8x128xf32>
    %5 = arith.addf %2, %4 : vector<8x128xf32>
    %cst_5 = arith.constant 0.000000e+00 : f32
    %6 = vector.broadcast %cst_5 : f32 to vector<8x128xf32>
    %7 = arith.maximumf %5, %6 : vector<8x128xf32>
    %c0_6 = arith.constant 0 : index
    %c0_7 = arith.constant 0 : index
    %8 = vector.load %arg4[%c0_6, %c0_7] : memref<128x1xf32, #tpu.memory_space<vmem>>, vector<128x1xf32>
    %cst_8 = arith.constant dense<0.000000e+00> : vector<8x1xf32>
    %9 = tpu.matmul %7, %8, %cst_8 {dimension_numbers = #tpu.dot_dimension_numbers<[1], [0], [0], [1], [0, 0, 1, 1], [], []>} : vector<8x128xf32>, vector<128x1xf32>, vector<8x1xf32> -> vector<8x1xf32>
    %c0_9 = arith.constant 0 : index
    %c0_10 = arith.constant 0 : index
    %10 = vector.load %arg5[%c0_9, %c0_10] : memref<1x1xf32, #tpu.memory_space<vmem>>, vector<1x1xf32>
    %11 = vector.broadcast %10 : vector<1x1xf32> to vector<8x1xf32>
    %12 = arith.addf %9, %11 : vector<8x1xf32>
    %c0_11 = arith.constant 0 : index
    %c0_12 = arith.constant 0 : index
    %13 = vector.load %arg6[%c0_11, %c0_12] : memref<8x1xf32, #tpu.memory_space<vmem>>, vector<8x1xf32>
    tpu.vector_store %arg6[%c0_11, %c0_12], %12 {strides = array<i32>} : memref<8x1xf32, #tpu.memory_space<vmem>>, vector<8x1xf32>,
    return
  }
  func.func @transform_0(%arg0: i32) -> (i32, i32) {
    %c0_i32 = arith.constant 0 : i32
    %c0_i32_0 = arith.constant 0 : i32
    return %arg0, %c0_i32 : i32, i32
  }
  func.func @transform_1(%arg0: i32) -> (i32, i32) {
    %c0_i32 = arith.constant 0 : i32
    %c0_i32_0 = arith.constant 0 : i32
    %c0_i32_1 = arith.constant 0 : i32
    return %c0_i32, %c0_i32_0 : i32, i32
  }
  func.func @transform_2(%arg0: i32) -> (i32, i32) {
    %c0_i32 = arith.constant 0 : i32
    %c0_i32_0 = arith.constant 0 : i32
    %c0_i32_1 = arith.constant 0 : i32
    return %c0_i32, %c0_i32_0 : i32, i32
  }
  func.func @transform_3(%arg0: i32) -> (i32, i32) {
    %c0_i32 = arith.constant 0 : i32
    %c0_i32_0 = arith.constant 0 : i32
    %c0_i32_1 = arith.constant 0 : i32
    return %c0_i32, %c0_i32_0 : i32, i32
  }
  func.func @transform_4(%arg0: i32) -> (i32, i32) {
    %c0_i32 = arith.constant 0 : i32
    %c0_i32_0 = arith.constant 0 : i32
    %c0_i32_1 = arith.constant 0 : i32
    return %c0_i32, %c0_i32_0 : i32, i32
  }
  func.func @transform_5(%arg0: i32) -> (i32, i32) {
    %c0_i32 = arith.constant 0 : i32
    %c0_i32_0 = arith.constant 0 : i32
    return %arg0, %c0_i32 : i32, i32
  }
}

</mosaic_0001>

<llo_original>
// kernel: tpu_custom_call.1
$region0: #{tpu_custom_call.1}
  #allocation0 [shape = 'u32[]', space=smem, size = 0x4, offset = 0x4, fixed_abs, tag = 'smem constant byte address 0x4 - core index']
  #allocation1 [shape = 'u32[144,128]{1,0:T(1,128)}', space=vmem, size = 0x12000, scoped, tag = 'internal scratch']
  #allocation2 [shape = 'f32[1,1]{1,0:T(1,128)S(1)}', space=vmem, size = 0x200, scoped, tag = 'scoped memory for tpu_custom_call.1']
  %s0 = inlined_call_operand.vmem [shape: f32[8,32], index: 0, kind: input, shape index: {}]
  %s1 = inlined_call_operand.vmem [shape: f32[32,128], index: 1, kind: input, shape index: {}]
  %s2 = inlined_call_operand.vmem [shape: f32[1,128], index: 2, kind: input, shape index: {}]
  %s3 = inlined_call_operand.vmem [shape: f32[128,1], index: 3, kind: input, shape index: {}]
  %s4 = inlined_call_operand.<no memory space> [shape: f32[1,1], index: 4, kind: input, shape index: {}]
  %s5 = inlined_call_operand.vmem [shape: f32[8,1], index: 5, kind: output, shape index: {}]
  %s6 = sld [smem:[#allocation0]]
  $region30: #{tpu_custom_call.1} parent=0
    _
  %s8 = ssub.s32 1, %s6
  %s9 = scalar_select 0, %s8, %s6
  %v10 = vstv %s4
  %11 = vst [vmem:[#allocation2] sm:$0x1] %v10
  // Predicated region
  $region2: #{tpu_custom_call.1} parent=0 // pred_check
    _
  $region3: #{tpu_custom_call.1} parent=0 // pred_check_branch
    %13 = sbr.rel (0) target = $region5
  $region4: #{tpu_custom_call.1} parent=0 // pred_region
    _
  $region5: #{tpu_custom_call.1} parent=0 // pred_fallthru
    _
  // Predicated region
  $region6: #{tpu_custom_call.1} parent=0 // pred_check
    _
  $region7: #{tpu_custom_call.1} parent=0 // pred_check_branch
    %15 = sbr.rel (0) target = $region9
  $region8: #{tpu_custom_call.1} parent=0 // pred_region
    _
  $region9: #{tpu_custom_call.1} parent=0 // pred_fallthru
    _
  // Predicated region
  $region10: #{tpu_custom_call.1} parent=0 // pred_check
    _
  $region11: #{tpu_custom_call.1} parent=0 // pred_check_branch
    %17 = sbr.rel (0) target = $region13
  $region12: #{tpu_custom_call.1} parent=0 // pred_region
    _
  $region13: #{tpu_custom_call.1} parent=0 // pred_fallthru
    _
  // Predicated region
  $region14: #{tpu_custom_call.1} parent=0 // pred_check
    _
  $region15: #{tpu_custom_call.1} parent=0 // pred_check_branch
    %19 = sbr.rel (0) target = $region17
  $region16: #{tpu_custom_call.1} parent=0 // pred_region
    _
  $region17: #{tpu_custom_call.1} parent=0 // pred_fallthru
    _
  // Predicated region
  $region18: #{tpu_custom_call.1} parent=0 // pred_check
    _
  $region19: #{tpu_custom_call.1} parent=0 // pred_check_branch
    %21 = sbr.rel (0) target = $region21
  $region20: #{tpu_custom_call.1} parent=0 // pred_region
    _
  $region21: #{tpu_custom_call.1} parent=0 // pred_fallthru
    _
  %v22 = vld [vmem:[%s0] sm:$0xff]
  %v23 = vld [vmem:[%s1] sm:$0xff]
  %v24 = vld [vmem:[%s1 + $0x8] sm:$0xff]
  %v25 = vld [vmem:[%s1 + $0x10] sm:$0xff]
  %v26 = vld [vmem:[%s1 + $0x18] sm:$0xff]
  %v27 = vld [vmem:[%s2] sm:$0x1]
  %v29 = vlaneseq
  %v30 = vshrl.u32 %v29, 7
  %v31 = vsub.s32 0, %v30
  %v32 = vrot.slane %v27, %v31
  %vm34 = vcmask 261120
  %v36 = vsel %vm34, %v22, 0
  %38 = vmatprep.subr.mxu0 0.0
  %39 = vmatpush1.msra.mxu0 %v23
  %40 = vmatprep.subr.mxu0 0.0
  %41 = vmatpush1.msra.mxu0 %v24
  %42 = vmatprep.subr.mxu0 0.0
  %43 = vmatpush1.msra.mxu0 %v25
  %44 = vmatprep.subr.mxu0 0.0
  %45 = vmatpush1.msra.mxu0 %v26
  %46 = vmatprep.subr.mxu0 0.0
  %47 = vmatpush1.msra.mxu0 0.0
  %48 = vmatprep.subr.mxu0 0.0
  %49 = vmatpush1.msra.mxu0 0.0
  %50 = vmatprep.subr.mxu0 0.0
  %51 = vmatpush1.msra.mxu0 0.0
  %52 = vmatprep.subr.mxu0 0.0
  %53 = vmatpush1.msra.mxu0 0.0
  %54 = vmatprep.subr.mxu0 0.0
  %55 = vmatpush1.msra.mxu0 0.0
  %56 = vmatprep.subr.mxu0 0.0
  %57 = vmatpush1.msra.mxu0 0.0
  %58 = vmatprep.subr.mxu0 0.0
  %59 = vmatpush1.msra.mxu0 0.0
  %60 = vmatprep.subr.mxu0 0.0
  %61 = vmatpush1.msra.mxu0 0.0
  %62 = vmatprep.subr.mxu0 0.0
  %63 = vmatpush1.msra.mxu0 0.0
  %64 = vmatprep.subr.mxu0 0.0
  %65 = vmatpush1.msra.mxu0 0.0
  %66 = vmatprep.subr.mxu0 0.0
  %67 = vmatpush1.msra.mxu0 0.0
  %68 = vmatprep.subr.mxu0 0.0
  %69 = vmatpush1.msra.mxu0 0.0
  %70 = vmatprep.subr.mxu0 0.0
  %71 = vmatpush1.msra.mxu0 0.0
  %72 = vmatprep.subr.mxu0 0.0
  %73 = vmatpush1.msra.mxu0 0.0
  %74 = vmatprep.subr.mxu0 0.0
  %75 = vmatpush1.msra.mxu0 0.0
  %76 = vmatprep.subr.mxu0 0.0
  %77 = vmatpush1.msra.mxu0 0.0
  %78 = vmatprep.subr.mxu0 0.0
  %79 = vmatpush1.msra.mxu0 0.0
  %80 = vmatprep.subr.mxu0 0.0
  %81 = vmatpush1.msra.mxu0 0.0
  %82 = vmatprep.subr.mxu0 0.0
  %83 = vmatpush1.msra.mxu0 0.0
  %84 = vmatprep.subr.mxu0 0.0
  %85 = vmatpush1.msra.mxu0 0.0
  %86 = vmatprep.subr.mxu0 0.0
  %87 = vmatpush1.msra.mxu0 0.0
  %88 = vmatprep.subr.mxu0 0.0
  %89 = vmatpush1.msra.mxu0 0.0
  %90 = vmatprep.subr.mxu0 0.0
  %91 = vmatpush1.msra.mxu0 0.0
  %92 = vmatprep.subr.mxu0 0.0
  %93 = vmatpush1.msra.mxu0 0.0
  %94 = vmatprep.subr.mxu0 0.0
  %95 = vmatpush1.msra.mxu0 0.0
  %96 = vmatprep.subr.mxu0 0.0
  %97 = vmatpush1.msra.mxu0 0.0
  %98 = vmatprep.subr.mxu0 0.0
  %99 = vmatpush1.msra.mxu0 0.0
  %100 = vmatprep.subr.mxu0 0.0
  %101 = vmatpush1.msra.mxu0 0.0
  %102 = vmatprep.mubr.f32.mxu0 0.0
  %103 = vmatmul.mubr.f32.gmra.mrb[0].mxu0 %v36
  %v104 = vpop.f32.mrb[0].mxu0
  %v105 = vadd.f32 %v32, %v104
  %v106 = vpop.f32.mrb[0].mxu0
  %107 = vdwg.mxu0
  %v108 = vmax.f32 %v105, 0.0
  %v109 = vld [vmem:[%s3] sm:$0xff]
  %v110 = vld [vmem:[%s3 + $0x8] sm:$0xff]
  %v111 = vld [vmem:[%s3 + $0x10] sm:$0xff]
  %v112 = vld [vmem:[%s3 + $0x18] sm:$0xff]
  %v113 = vld [vmem:[%s3 + $0x20] sm:$0xff]
  %v114 = vld [vmem:[%s3 + $0x28] sm:$0xff]
  %v115 = vld [vmem:[%s3 + $0x30] sm:$0xff]
  %v116 = vld [vmem:[%s3 + $0x38] sm:$0xff]
  %v117 = vld [vmem:[%s3 + $0x40] sm:$0xff]
  %v118 = vld [vmem:[%s3 + $0x48] sm:$0xff]
  %v119 = vld [vmem:[%s3 + $0x50] sm:$0xff]
  %v120 = vld [vmem:[%s3 + $0x58] sm:$0xff]
  %v121 = vld [vmem:[%s3 + $0x60] sm:$0xff]
  %v122 = vld [vmem:[%s3 + $0x68] sm:$0xff]
  %v123 = vld [vmem:[%s3 + $0x70] sm:$0xff]
  %v124 = vld [vmem:[%s3 + $0x78] sm:$0xff]
  %v125 = vld [vmem:[#allocation2] sm:$0x1]
  %v127 = vlaneseq
  %v128 = vshrl.u32 %v127, 7
  %v129 = vsub.s32 0, %v128
  %v130 = vrot.slane %v125, %v129
  %132 = vmatprep.subr.mxu0 0.0
  %133 = vmatpush1.msra.mxu0 %v109
  %134 = vmatprep.subr.mxu0 0.0
  %135 = vmatpush1.msra.mxu0 %v110
  %136 = vmatprep.subr.mxu0 0.0
  %137 = vmatpush1.msra.mxu0 %v111
  %138 = vmatprep.subr.mxu0 0.0
  %139 = vmatpush1.msra.mxu0 %v112
  %140 = vmatprep.subr.mxu0 0.0
  %141 = vmatpush1.msra.mxu0 %v113
  %142 = vmatprep.subr.mxu0 0.0
  %143 = vmatpush1.msra.mxu0 %v114
  %144 = vmatprep.subr.mxu0 0.0
  %145 = vmatpush1.msra.mxu0 %v115
  %146 = vmatprep.subr.mxu0 0.0
  %147 = vmatpush1.msra.mxu0 %v116
  %148 = vmatprep.subr.mxu0 0.0
  %149 = vmatpush1.msra.mxu0 %v117
  %150 = vmatprep.subr.mxu0 0.0
  %151 = vmatpush1.msra.mxu0 %v118
  %152 = vmatprep.subr.mxu0 0.0
  %153 = vmatpush1.msra.mxu0 %v119
  %154 = vmatprep.subr.mxu0 0.0
  %155 = vmatpush1.msra.mxu0 %v120
  %156 = vmatprep.subr.mxu0 0.0
  %157 = vmatpush1.msra.mxu0 %v121
  %158 = vmatprep.subr.mxu0 0.0
  %159 = vmatpush1.msra.mxu0 %v122
  %160 = vmatprep.subr.mxu0 0.0
  %161 = vmatpush1.msra.mxu0 %v123
  %162 = vmatprep.subr.mxu0 0.0
  %163 = vmatpush1.msra.mxu0 %v124
  %164 = vmatprep.subr.mxu0 0.0
  %165 = vmatpush1.msra.mxu0 0.0
  %166 = vmatprep.subr.mxu0 0.0
  %167 = vmatpush1.msra.mxu0 0.0
  %168 = vmatprep.subr.mxu0 0.0
  %169 = vmatpush1.msra.mxu0 0.0
  %170 = vmatprep.subr.mxu0 0.0
  %171 = vmatpush1.msra.mxu0 0.0
  %172 = vmatprep.subr.mxu0 0.0
  %173 = vmatpush1.msra.mxu0 0.0
  %174 = vmatprep.subr.mxu0 0.0
  %175 = vmatpush1.msra.mxu0 0.0
  %176 = vmatprep.subr.mxu0 0.0
  %177 = vmatpush1.msra.mxu0 0.0
  %178 = vmatprep.subr.mxu0 0.0
  %179 = vmatpush1.msra.mxu0 0.0
  %180 = vmatprep.subr.mxu0 0.0
  %181 = vmatpush1.msra.mxu0 0.0
  %182 = vmatprep.subr.mxu0 0.0
  %183 = vmatpush1.msra.mxu0 0.0
  %184 = vmatprep.subr.mxu0 0.0
  %185 = vmatpush1.msra.mxu0 0.0
  %186 = vmatprep.subr.mxu0 0.0
  %187 = vmatpush1.msra.mxu0 0.0
  %188 = vmatprep.subr.mxu0 0.0
  %189 = vmatpush1.msra.mxu0 0.0
  %190 = vmatprep.subr.mxu0 0.0
  %191 = vmatpush1.msra.mxu0 0.0
  %192 = vmatprep.subr.mxu0 0.0
  %193 = vmatpush1.msra.mxu0 0.0
  %194 = vmatprep.subr.mxu0 0.0
  %195 = vmatpush1.msra.mxu0 0.0
  %196 = vmatprep.mubr.f32.mxu0 0.0
  %197 = vmatmul.mubr.f32.gmra.mrb[0].mxu0 %v108
  %v198 = vpop.f32.mrb[0].mxu0
  %v199 = vadd.f32 %v130, %v198
  %v200 = vpop.f32.mrb[0].mxu0
  %201 = vdwg.mxu0
  %vm202 = vcmask 7168
  %203 = vst.msk [vmem:[%s5] sm:$0xff] %vm202, %v199
  // Predicated region
  $region22: #{tpu_custom_call.1} parent=0 // pred_check
    _
  $region23: #{tpu_custom_call.1} parent=0 // pred_check_branch
    %205 = sbr.rel (0) target = $region25
  $region24: #{tpu_custom_call.1} parent=0 // pred_region
    _
  $region25: #{tpu_custom_call.1} parent=0 // pred_fallthru
    _
  // Predicated region
  $region26: #{tpu_custom_call.1} parent=0 // pred_check
    _
  $region27: #{tpu_custom_call.1} parent=0 // pred_check_branch
    %207 = sbr.rel (0) target = $region29
  $region28: #{tpu_custom_call.1} parent=0 // pred_region
    _
  $region29: #{tpu_custom_call.1} parent=0 // pred_fallthru
    _

</llo_original>
